<compile_context>
chip_gen: v7x
topology: tpu7x:2x2x1
jax: 0.10.0
libtpu: 0.0.40
codegen_flags: <defaults>
</compile_context>

<pallas_src>
import functools

import jax
import jax.numpy as jnp
from jax import lax
from jax.experimental import pallas as pl
from jax.experimental.pallas import tpu as pltpu


def _round_up(x, m):
    return ((x + m - 1) // m) * m


# ---------------------------------------------------------------------------
# Generation-aware sizing helpers
# ---------------------------------------------------------------------------
def _tpu_vmem_capacity_bytes():
    try:
        cap = int(getattr(pltpu.get_tpu_info(), "vmem_capacity_bytes", 0))
        if cap > 0:
            return cap
    except Exception:
        pass
    try:
        kind = jax.devices()[0].device_kind.lower()
        if "7" in kind:                      # v7x: 64 MiB per TensorCore
            return 64 * 1024 * 1024
    except Exception:
        pass
    return 128 * 1024 * 1024                 # v5e / v6e


def _vmem_limit_bytes(capacity):
    if capacity <= 64 * 1024 * 1024:         # v7x: leave ~6 MiB headroom
        return capacity - 6 * 1024 * 1024
    # v5e / v6e: raise above the 32 MiB scoped default, keep headroom.
    return min(capacity - 16 * 1024 * 1024, 112 * 1024 * 1024)


def _is_dual_tensorcore():
    try:
        return "7" in jax.devices()[0].device_kind.lower()
    except Exception:
        return False


def _pick_time_block(T, B_shard, Ng, w_bytes, out_bytes, vmem_limit):
    """Largest divisor Tb of T whose double-buffered output block + resident
    W_hh + state scratch fit the per-generation VMEM budget."""
    fixed = Ng * Ng * w_bytes + 3 * B_shard * Ng * 4 + 2 * 2 * Ng * 4
    budget = int(vmem_limit * 0.85) - fixed
    best = 1
    for tb in range(1, min(T, 32) + 1):
        if T % tb:
            continue
        per_block = 2 * tb * B_shard * (Ng * out_bytes + 2 * 4)
        if per_block <= budget:
            best = tb
    return best


def _pick_row_tile(n_rows, Ng, Np, w_bytes, in_bytes, vmem_limit, target):
    """Largest divisor of n_rows (multiple of 8) <= VMEM-derived target."""
    budget = int(vmem_limit * 0.85) - 2 * Ng * Np * w_bytes
    per_row = 2 * (Ng * in_bytes + Np * 4)
    if budget > 0:
        target = min(int(target), max(8, budget // per_row))
    best, cand = 8, 8
    limit = min(int(target), n_rows)
    while cand <= limit:
        if n_rows % cand == 0:
            best = cand
        cand += 8
    return best


# ---------------------------------------------------------------------------
# Recurrent (AdaptationRNN) kernel: produces grid-cell activities gs only.
# Grid: (batch_shard ["parallel"], time_block ["arbitrary"]).
# ---------------------------------------------------------------------------
def _recurrent_kernel(v_ref, w_ih_ref, w_hh_hbm, h0_hbm,      # inputs
                      gs_ref,                                  # output
                      h_sc, zp_sc, va_sc, w_hh_vmem, dma_sem,  # scratch
                      *, alpha, beta, non_negativity, tb, b_shard):
    s = pl.program_id(0)          # batch shard (megacore-parallel on v7x)
    t = pl.program_id(1)          # sequential time block

    @pl.when(t == 0)
    def _init():
        # Single-buffered resident W_hh^T: one manual HBM->VMEM copy per batch
        # shard, reused by every sequential time block (the auto-pipeline
        # would double-buffer a grid-invariant 32-64 MB weight).
        cp_w = pltpu.make_async_copy(w_hh_hbm, w_hh_vmem, dma_sem.at[0])
        cp_w.start()
        # h0 goes straight from HBM into the persistent state scratch instead
        # of a double-buffered (read-once) BlockSpec block.
        row0 = pl.multiple_of(s * b_shard, 8)
        cp_h = pltpu.make_async_copy(h0_hbm.at[pl.ds(row0, b_shard), :],
                                     h_sc, dma_sem.at[1])
        cp_h.start()
        zp_sc[...] = jnp.zeros_like(zp_sc)
        va_sc[...] = jnp.zeros_like(va_sc)
        cp_w.wait()
        cp_h.wait()
        # TODO(synk): panelize the one-shot W_hh copy (per-panel semaphores +
        # a panelized first-step matmul) to hide the startup DMA latency.

    # Hoisted, grid-invariant loads.
    w_hh = w_hh_vmem[...]                    # (Ng, Ng) == W_hh.T (resident)
    w0 = w_ih_ref[0:1, :]                    # (1, Ng)  row 0 of W_ih.T
    w1 = w_ih_ref[1:2, :]                    # (1, Ng)  row 1 of W_ih.T

    def step(i, carry):
        h, zp, va = carry
        vt = v_ref[i]                        # (B_shard, 2)
        # K=2 input projection as VPU broadcast-MACs: v_t @ W_ih.T
        z = vt[:, 0:1] * w0 + vt[:, 1:2] * w1
        # Recurrent term on the MXU: h @ W_hh.T (f32 accumulation).
        z = z + jnp.dot(h.astype(w_hh.dtype), w_hh,
                        preferred_element_type=jnp.float32)
        z = z - beta * va
        va = va + alpha * (zp - va)          # adaptation uses previous z
        if non_negativity:
            va = jnp.maximum(va, 0.0)
        s_z = jnp.maximum(z, 0.0)            # relu -> grid-cell activities
        gs_ref[i] = s_z.astype(gs_ref.dtype)
        return (s_z, z, va)

    # Cap the unroll: steady state is MXU/weight-stream bound; full unroll at
    # large Tb only multiplies live (B, Ng) temporaries and code size.
    h, zp, va = lax.fori_loop(0, tb, step,
                              (h_sc[...], zp_sc[...], va_sc[...]),
                              unroll=max(1, min(tb, 4)))
    h_sc[...] = h
    zp_sc[...] = zp
    va_sc[...] = va

    # TODO(synk): z_history / v_history / mean_activity numpy instrumentation
    # and silenced_neurons masking in AdaptationRNN are host-side debugging
    # hooks; omitted.


# ---------------------------------------------------------------------------
# Hoisted decoder + log_softmax kernel, batched over all T*B_pad rows
# (row order is irrelevant to log_softmax, so no transpose is needed).
# ---------------------------------------------------------------------------
def _decoder_kernel(gs_ref, w_dec_ref, logp_ref):
    preds = jnp.dot(gs_ref[...].astype(w_dec_ref.dtype), w_dec_ref[...],
                    preferred_element_type=jnp.float32)
    m = jnp.max(preds, axis=-1, keepdims=True)
    lse = jnp.log(jnp.sum(jnp.exp(preds - m), axis=-1, keepdims=True)) + m
    logp_ref[...] = (preds - lse).astype(logp_ref.dtype)
    # TODO(synk): on v5e this decoder could be fused into the recurrent
    # kernel's per-time-block epilogue (W_dec^T resident) to avoid re-reading
    # gs from HBM; kept separate so the "parallel" grid can use both TCs on
    # v7x and VMEM stays within its 64 MiB budget.


# ---------------------------------------------------------------------------
# Wrapper
# ---------------------------------------------------------------------------
def sorscher_rnn_forward(v, p0, params, *, alpha=0.0, beta=0.0,
                         non_negativity=False, time_block=None,
                         weights_dtype=None, gs_dtype=jnp.float32,
                         batch_shards=None):
    """v: (B, T, 2) f32, p0: (B, Np) f32 -> (log_preds (B,T,Np), gs (B,T,Ng))."""
    w_enc = params["w_enc"]   # (Ng, Np)  init_position_encoder.weight
    w_ih = params["w_ih"]     # (Ng, 2)   RNN.weight_ih_l0
    w_hh = params["w_hh"]     # (Ng, Ng)  RNN.weight_hh_l0
    w_dec = params["w_dec"]   # (Np, Ng)  decoder.weight

    B, T, _ = v.shape
    Ng, Np = w_enc.shape

    vmem_cap = _tpu_vmem_capacity_bytes()
    vmem_limit = _vmem_limit_bytes(vmem_cap)

    if weights_dtype is None:
        # bf16 resident MXU weights: mandatory on v7x at production Ng (f32
        # W_hh alone is the whole 64 MiB VMEM), preferred on v5e/v6e too
        # (2x MXU rate, half the per-step weight stream). f32 accumulation
        # and f32 elementwise math are kept regardless.
        weights_dtype = jnp.bfloat16
    w_bytes = jnp.dtype(weights_dtype).itemsize
    gs_bytes = jnp.dtype(gs_dtype).itemsize

    # Batch sharding across TensorCores (v7x has 2 TCs); 1 on v5e/v6e.
    if batch_shards is None:
        batch_shards = 2 if (_is_dual_tensorcore() and B > 8) else 1
    n_shards = max(1, int(batch_shards))
    B_pad = max(8 * n_shards, _round_up(B, 8 * n_shards))
    B_shard = B_pad // n_shards

    # ---- cheap wrapper-side glue (plain XLA) ----
    h0 = jnp.dot(p0.astype(jnp.float32), w_enc.T.astype(jnp.float32))  # (B, Ng)
    w_ih_t = w_ih.T.astype(jnp.float32)        # (2, Ng)  VPU operand, keep f32
    w_hh_t = w_hh.T.astype(weights_dtype)      # (Ng, Ng) resident MXU operand
    w_dec_t = w_dec.T.astype(weights_dtype)    # (Ng, Np) MXU operand

    v_tm = jnp.transpose(v, (1, 0, 2)).astype(jnp.float32)   # (T, B, 2) tiny
    if B_pad != B:
        v_tm = jnp.pad(v_tm, ((0, 0), (0, B_pad - B), (0, 0)))
        h0 = jnp.pad(h0, ((0, B_pad - B), (0, 0)))

    # VMEM-aware time blocking (amortize per-grid-step overhead without
    # blowing the per-generation VMEM budget).
    if time_block is None:
        Tb = _pick_time_block(T, B_shard, Ng, w_bytes, gs_bytes, vmem_limit)
    else:
        Tb = int(time_block)
        assert T % Tb == 0, "time_block must divide T"

    kernel = functools.partial(_recurrent_kernel, alpha=float(alpha),
                               beta=float(beta),
                               non_negativity=bool(non_negativity),
                               tb=Tb, b_shard=B_shard)

    gs_tm = pl.pallas_call(
        kernel,
        out_shape=jax.ShapeDtypeStruct((T, B_pad, Ng), gs_dtype),
        grid_spec=pltpu.PrefetchScalarGridSpec(
            num_scalar_prefetch=0,
            grid=(n_shards, T // Tb),
            in_specs=[
                pl.BlockSpec((Tb, B_shard, 2), lambda s, t: (t, s, 0)),  # v
                pl.BlockSpec((2, Ng), lambda s, t: (0, 0)),              # W_ih.T
                pl.BlockSpec(memory_space=pl.ANY),                       # W_hh.T
                pl.BlockSpec(memory_space=pl.ANY),                       # h0
            ],
            out_specs=pl.BlockSpec((Tb, B_shard, Ng), lambda s, t: (t, s, 0)),
            scratch_shapes=[
                pltpu.VMEM((B_shard, Ng), jnp.float32),   # hidden state
                pltpu.VMEM((B_shard, Ng), jnp.float32),   # z_prev
                pltpu.VMEM((B_shard, Ng), jnp.float32),   # adaptation v
                pltpu.VMEM((Ng, Ng), w_hh_t.dtype),       # resident W_hh.T (1x)
                pltpu.SemaphoreType.DMA((2,)),            # W_hh / h0 copies
            ]),
        compiler_params=pltpu.CompilerParams(
            dimension_semantics=("parallel", "arbitrary"),
            vmem_limit_bytes=vmem_limit),
    )(v_tm, w_ih_t, w_hh_t, h0)

    # ---- decoder + log_softmax over all T*B_pad rows, straight off the
    #      recurrent kernel's time-major layout (no transpose / re-pad) ----
    n_rows = T * B_pad
    rows = gs_tm.reshape(n_rows, Ng)            # free reshape (merge leading dims)
    row_target = 512 if vmem_cap <= 64 * 1024 * 1024 else 1024
    row_tile = _pick_row_tile(n_rows, Ng, Np, w_bytes, gs_bytes,
                              vmem_limit, row_target)

    logp_rows = pl.pallas_call(
        _decoder_kernel,
        out_shape=jax.ShapeDtypeStruct((n_rows, Np), jnp.float32),
        grid_spec=pltpu.PrefetchScalarGridSpec(
            num_scalar_prefetch=0,
            grid=(n_rows // row_tile,),
            in_specs=[
                pl.BlockSpec((row_tile, Ng), lambda r: (r, 0)),
                pl.BlockSpec((Ng, Np), lambda r: (0, 0)),
            ],
            out_specs=pl.BlockSpec((row_tile, Np), lambda r: (r, 0))),
        compiler_params=pltpu.CompilerParams(
            dimension_semantics=("parallel",),
            vmem_limit_bytes=vmem_limit),
    )(rows, w_dec_t)

    # Only the small (Np-wide) log-prob tensor is transposed back to
    # batch-major; the gs transpose below is caller-facing glue only and is
    # NOT on the decoder path (layout-invariant consumers can use gs_tm).
    logp = jnp.transpose(logp_rows.reshape(T, B_pad, Np)[:, :B, :], (1, 0, 2))
    gs = jnp.transpose(gs_tm[:, :B, :], (1, 0, 2)).astype(jnp.float32)
    return logp, gs


# ---------------------------------------------------------------------------
# Pure-JAX reference and test
# ---------------------------------------------------------------------------
def _reference_forward(v, p0, params, alpha, beta, non_negativity,
                       mxu_dtype=jnp.float32):
    """Mirrors PyTorch SorscherRNN.forward; MXU operands rounded to mxu_dtype
    (matching the kernel's resident-weight precision), f32 accumulation."""
    w_enc, w_ih, w_hh, w_dec = (params["w_enc"], params["w_ih"],
                                params["w_hh"], params["w_dec"])

    def mm(a, b):
        return jnp.dot(a.astype(mxu_dtype), b.astype(mxu_dtype),
                       preferred_element_type=jnp.float32)

    h = jnp.dot(p0, w_enc.T)            # position encoder stays f32
    va = jnp.zeros_like(h)
    zp = jnp.zeros_like(h)
    gs_list = []
    for t in range(v.shape[1]):
        z = v[:, t] @ w_ih.T + mm(h, w_hh.T) - beta * va
        va = va + alpha * (zp - va)
        if non_negativity:
            va = jnp.maximum(va, 0.0)
        s = jnp.maximum(z, 0.0)
        gs_list.append(s)
        h = s
        zp = z
    gs = jnp.stack(gs_list, axis=1)
    B, T, Ng = gs.shape
    preds = mm(gs.reshape(B * T, Ng), w_dec.T).reshape(B, T, -1)
    return jax.nn.log_softmax(preds, axis=-1), gs


def _xavier_uniform(key, shape):
    fan_out, fan_in = shape
    bound = (6.0 / (fan_in + fan_out)) ** 0.5
    return jax.random.uniform(key, shape, jnp.float32, -bound, bound)


if __name__ == "__main__":
    # Small shapes consistent with the module (Ng=4096, Np=512 scaled down).
    B, T, Ng, Np = 2, 8, 256, 128
    alpha, beta = 0.3, 0.5

    key = jax.random.PRNGKey(0)
    k_enc, k_ih, k_hh, k_dec, k_v, k_p0, k_v2, k_p2 = jax.random.split(key, 8)
    params = {
        "w_enc": _xavier_uniform(k_enc, (Ng, Np)),   # init_position_encoder.weight
        "w_ih": _xavier_uniform(k_ih, (Ng, 2)),      # RNN.weight_ih_l0
        "w_hh": _xavier_uniform(k_hh, (Ng, Ng)),     # RNN.weight_hh_l0
        "w_dec": _xavier_uniform(k_dec, (Np, Ng)),   # decoder.weight
    }
    v = 0.1 * jax.random.normal(k_v, (B, T, 2), jnp.float32)   # velocities
    p0 = jax.random.normal(k_p0, (B, Np), jnp.float32)         # initial place code

    # --- 1) f32 resident weights, explicit time blocking, single shard ---
    logp, gs = sorscher_rnn_forward(v, p0, params, alpha=alpha, beta=beta,
                                    non_negativity=False, time_block=4,
                                    weights_dtype=jnp.float32, batch_shards=1)
    logp, gs = jax.block_until_ready((logp, gs))
    logp_ref, gs_ref = _reference_forward(v, p0, params, alpha, beta, False)
    assert logp.shape == (B, T, Np) and gs.shape == (B, T, Ng)
    assert jnp.allclose(gs, gs_ref, atol=2e-4, rtol=2e-4)
    assert jnp.allclose(logp, logp_ref, atol=2e-4, rtol=2e-4)

    # --- 2) bf16 resident weights (VMEM-fit / bf16-MXU path, f32 accumulation
    #     and f32 elementwise math), non-negativity branch, auto Tb / tiles ---
    logp_bf, gs_bf = sorscher_rnn_forward(v, p0, params, alpha=alpha, beta=beta,
                                          non_negativity=True,
                                          weights_dtype=jnp.bfloat16,
                                          batch_shards=1)
    logp_bf, gs_bf = jax.block_until_ready((logp_bf, gs_bf))
    logp_refb, gs_refb = _reference_forward(v, p0, params, alpha, beta, True,
                                            mxu_dtype=jnp.bfloat16)
    assert jnp.allclose(gs_bf, gs_refb, atol=1e-2, rtol=1e-2)
    assert jnp.allclose(logp_bf, logp_refb, atol=1e-2, rtol=1e-2)

    # --- 3) dual-TensorCore-style batch sharding path (leading "parallel"
    #     grid axis); also valid (sequential) on single-TC v5e/v6e ---
    B2 = 16
    v2 = 0.1 * jax.random.normal(k_v2, (B2, T, 2), jnp.float32)
    p02 = jax.random.normal(k_p2, (B2, Np), jnp.float32)
    logp2, gs2 = sorscher_rnn_forward(v2, p02, params, alpha=alpha, beta=beta,
                                      non_negativity=False,
                                      weights_dtype=jnp.float32,
                                      batch_shards=2)
    logp2, gs2 = jax.block_until_ready((logp2, gs2))
    logp2_ref, gs2_ref = _reference_forward(v2, p02, params, alpha, beta, False)
    assert jnp.allclose(gs2, gs2_ref, atol=2e-4, rtol=2e-4)
    assert jnp.allclose(logp2, logp2_ref, atol=2e-4, rtol=2e-4)

    print("KERNEL_OK")
</pallas_src>

<mosaic_0001>
module attributes {stable_mosaic.version = 11 : i64} {
  func.func @_recurrent_kernel(%arg0: i32, %arg1: i32, %arg2: memref<4x8x2xf32, #tpu.memory_space<vmem>>, %arg3: memref<2x256xf32, #tpu.memory_space<vmem>>, %arg4: memref<256x256xf32, #tpu.memory_space<any>>, %arg5: memref<8x256xf32, #tpu.memory_space<any>>, %arg6: memref<4x8x256xf32, #tpu.memory_space<vmem>>, %arg7: memref<8x256xf32, #tpu.memory_space<vmem>>, %arg8: memref<8x256xf32, #tpu.memory_space<vmem>>, %arg9: memref<8x256xf32, #tpu.memory_space<vmem>>, %arg10: memref<256x256xf32, #tpu.memory_space<vmem>>, %arg11: memref<2x!tpu.dma_semaphore, #tpu.memory_space<semaphore_mem>>) attributes {dimension_semantics = [#tpu.dimension_semantics<parallel>, #tpu.dimension_semantics<arbitrary>], iteration_bounds = array<i64: 1, 2>, scalar_prefetch = 0 : i64, scratch_operands = 5 : i64, tpu.core_type = #tpu.core_type<tc>, window_params = [{transform_indices = @transform_0, window_bounds = array<i64: 4, 8, 2>}, {pipeline_mode = #tpu.pipeline_mode<synchronous>, transform_indices = @transform_1, window_bounds = array<i64: 2, 256>}, {}, {}, {transform_indices = @transform_4, window_bounds = array<i64: 4, 8, 256>}]} {
    %c0_i32 = arith.constant 0 : i32
    %0 = arith.cmpi eq, %arg1, %c0_i32 : i32
    %1 = arith.extui %0 : i1 to i32
    %c0_i32_0 = arith.constant 0 : i32
    %2 = arith.cmpi ne, %1, %c0_i32_0 : i32
    scf.if %2 {
      %c0_i32_49 = arith.constant 0 : i32
      %120 = tpu.memref_slice %arg11[%c0_i32_49] : memref<2x!tpu.dma_semaphore, #tpu.memory_space<semaphore_mem>> -> memref<1x!tpu.dma_semaphore, #tpu.memory_space<semaphore_mem>>
      %121 = tpu.memref_squeeze %120 : memref<1x!tpu.dma_semaphore, #tpu.memory_space<semaphore_mem>> -> memref<!tpu.dma_semaphore, #tpu.memory_space<semaphore_mem>>
      tpu.enqueue_dma source(%arg4 : memref<256x256xf32, #tpu.memory_space<any>>) target(%arg10 : memref<256x256xf32, #tpu.memory_space<vmem>>) target_semaphore(%121 : memref<!tpu.dma_semaphore, #tpu.memory_space<semaphore_mem>>)
      %c8_i32 = arith.constant 8 : i32
      %122 = arith.muli %arg0, %c8_i32 : i32
      %123 = tpu.assume_multiple %122, 8 : i32
      %c1_i32_50 = arith.constant 1 : i32
      %c0_i32_51 = arith.constant 0 : i32
      %124 = tpu.memref_slice %arg5[%123, %c0_i32_51] : memref<8x256xf32, #tpu.memory_space<any>> -> memref<8x256xf32, #tpu.memory_space<any>>
      %125 = tpu.memref_slice %arg11[%c1_i32_50] : memref<2x!tpu.dma_semaphore, #tpu.memory_space<semaphore_mem>> -> memref<1x!tpu.dma_semaphore, #tpu.memory_space<semaphore_mem>>
      %126 = tpu.memref_squeeze %125 : memref<1x!tpu.dma_semaphore, #tpu.memory_space<semaphore_mem>> -> memref<!tpu.dma_semaphore, #tpu.memory_space<semaphore_mem>>
      tpu.enqueue_dma source(%124 : memref<8x256xf32, #tpu.memory_space<any>>) target(%arg7 : memref<8x256xf32, #tpu.memory_space<vmem>>) target_semaphore(%126 : memref<!tpu.dma_semaphore, #tpu.memory_space<semaphore_mem>>)
      %cst_52 = arith.constant 0.000000e+00 : f32
      %127 = vector.broadcast %cst_52 : f32 to vector<8x256xf32>
      %c0_53 = arith.constant 0 : index
      %c0_54 = arith.constant 0 : index
      %128 = vector.load %arg8[%c0_53, %c0_54] : memref<8x256xf32, #tpu.memory_space<vmem>>, vector<8x256xf32>
      tpu.vector_store %arg8[%c0_53, %c0_54], %127 {strides = array<i32>} : memref<8x256xf32, #tpu.memory_space<vmem>>, vector<8x256xf32>,
      %cst_55 = arith.constant 0.000000e+00 : f32
      %129 = vector.broadcast %cst_55 : f32 to vector<8x256xf32>
      %c0_56 = arith.constant 0 : index
      %c0_57 = arith.constant 0 : index
      %130 = vector.load %arg9[%c0_56, %c0_57] : memref<8x256xf32, #tpu.memory_space<vmem>>, vector<8x256xf32>
      tpu.vector_store %arg9[%c0_56, %c0_57], %129 {strides = array<i32>} : memref<8x256xf32, #tpu.memory_space<vmem>>, vector<8x256xf32>,
      %c0_i32_58 = arith.constant 0 : i32
      %131 = tpu.memref_slice %arg11[%c0_i32_58] : memref<2x!tpu.dma_semaphore, #tpu.memory_space<semaphore_mem>> -> memref<1x!tpu.dma_semaphore, #tpu.memory_space<semaphore_mem>>
      %132 = tpu.memref_squeeze %131 : memref<1x!tpu.dma_semaphore, #tpu.memory_space<semaphore_mem>> -> memref<!tpu.dma_semaphore, #tpu.memory_space<semaphore_mem>>
      tpu.wait_dma2 semaphore(%132 : memref<!tpu.dma_semaphore, #tpu.memory_space<semaphore_mem>>) src(%arg4 : memref<256x256xf32, #tpu.memory_space<any>>) dst(%arg10 : memref<256x256xf32, #tpu.memory_space<vmem>>)
      %c1_i32_59 = arith.constant 1 : i32
      %c0_i32_60 = arith.constant 0 : i32
      %133 = tpu.memref_slice %arg5[%123, %c0_i32_60] : memref<8x256xf32, #tpu.memory_space<any>> -> memref<8x256xf32, #tpu.memory_space<any>>
      %134 = tpu.memref_slice %arg11[%c1_i32_59] : memref<2x!tpu.dma_semaphore, #tpu.memory_space<semaphore_mem>> -> memref<1x!tpu.dma_semaphore, #tpu.memory_space<semaphore_mem>>
      %135 = tpu.memref_squeeze %134 : memref<1x!tpu.dma_semaphore, #tpu.memory_space<semaphore_mem>> -> memref<!tpu.dma_semaphore, #tpu.memory_space<semaphore_mem>>
      tpu.wait_dma2 semaphore(%135 : memref<!tpu.dma_semaphore, #tpu.memory_space<semaphore_mem>>) src(%133 : memref<8x256xf32, #tpu.memory_space<any>>) dst(%arg7 : memref<8x256xf32, #tpu.memory_space<vmem>>)
    } else {
    }
    %c0 = arith.constant 0 : index
    %c0_1 = arith.constant 0 : index
    %3 = vector.load %arg10[%c0, %c0_1] : memref<256x256xf32, #tpu.memory_space<vmem>>, vector<256x256xf32>
    %c0_2 = arith.constant 0 : index
    %c0_3 = arith.constant 0 : index
    %4 = vector.load %arg3[%c0_2, %c0_3] : memref<2x256xf32, #tpu.memory_space<vmem>>, vector<1x256xf32>
    %c1 = arith.constant 1 : index
    %c0_4 = arith.constant 0 : index
    %5 = vector.load %arg3[%c1, %c0_4] : memref<2x256xf32, #tpu.memory_space<vmem>>, vector<1x256xf32>
    %c0_5 = arith.constant 0 : index
    %c0_6 = arith.constant 0 : index
    %6 = vector.load %arg7[%c0_5, %c0_6] : memref<8x256xf32, #tpu.memory_space<vmem>>, vector<8x256xf32>
    %c0_7 = arith.constant 0 : index
    %c0_8 = arith.constant 0 : index
    %7 = vector.load %arg8[%c0_7, %c0_8] : memref<8x256xf32, #tpu.memory_space<vmem>>, vector<8x256xf32>
    %c0_9 = arith.constant 0 : index
    %c0_10 = arith.constant 0 : index
    %8 = vector.load %arg9[%c0_9, %c0_10] : memref<8x256xf32, #tpu.memory_space<vmem>>, vector<8x256xf32>
    %c0_i32_11 = arith.constant 0 : i32
    %9 = arith.index_cast %c0_i32_11 : i32 to index
    %c0_12 = arith.constant 0 : index
    %c0_13 = arith.constant 0 : index
    %10 = vector.load %arg2[%9, %c0_12, %c0_13] : memref<4x8x2xf32, #tpu.memory_space<vmem>>, vector<1x8x2xf32>
    %11 = vector.shape_cast %10 : vector<1x8x2xf32> to vector<8x2xf32>
    %12 = vector.extract_strided_slice %11 {offsets = [0, 0], sizes = [8, 1], strides = [1, 1]} : vector<8x2xf32> to vector<8x1xf32>
    %13 = vector.broadcast %12 : vector<8x1xf32> to vector<8x256xf32>
    %14 = vector.broadcast %4 : vector<1x256xf32> to vector<8x256xf32>
    %15 = arith.mulf %13, %14 : vector<8x256xf32>
    %16 = vector.extract_strided_slice %11 {offsets = [0, 1], sizes = [8, 1], strides = [1, 1]} : vector<8x2xf32> to vector<8x1xf32>
    %17 = vector.broadcast %16 : vector<8x1xf32> to vector<8x256xf32>
    %18 = vector.broadcast %5 : vector<1x256xf32> to vector<8x256xf32>
    %19 = arith.mulf %17, %18 : vector<8x256xf32>
    %20 = arith.addf %15, %19 : vector<8x256xf32>
    %cst = arith.constant dense<0.000000e+00> : vector<8x256xf32>
    %21 = tpu.matmul %6, %3, %cst {dimension_numbers = #tpu.dot_dimension_numbers<[1], [0], [0], [1], [0, 0, 1, 1], [], []>} : vector<8x256xf32>, vector<256x256xf32>, vector<8x256xf32> -> vector<8x256xf32>
    %22 = arith.addf %20, %21 : vector<8x256xf32>
    %cst_14 = arith.constant 5.000000e-01 : f32
    %23 = vector.broadcast %cst_14 : f32 to vector<8x256xf32>
    %24 = arith.mulf %23, %8 : vector<8x256xf32>
    %25 = arith.subf %22, %24 : vector<8x256xf32>
    %26 = arith.subf %7, %8 : vector<8x256xf32>
    %cst_15 = arith.constant 3.000000e-01 : f32
    %27 = vector.broadcast %cst_15 : f32 to vector<8x256xf32>
    %28 = arith.mulf %27, %26 : vector<8x256xf32>
    %29 = arith.addf %8, %28 : vector<8x256xf32>
    %cst_16 = arith.constant 0.000000e+00 : f32
    %30 = vector.broadcast %cst_16 : f32 to vector<8x256xf32>
    %31 = arith.maximumf %25, %30 : vector<8x256xf32>
    %32 = arith.index_cast %c0_i32_11 : i32 to index
    %c0_17 = arith.constant 0 : index
    %c0_18 = arith.constant 0 : index
    %33 = vector.load %arg6[%32, %c0_17, %c0_18] : memref<4x8x256xf32, #tpu.memory_space<vmem>>, vector<1x8x256xf32>
    %34 = vector.shape_cast %33 : vector<1x8x256xf32> to vector<8x256xf32>
    %35 = vector.shape_cast %31 : vector<8x256xf32> to vector<1x8x256xf32>
    tpu.vector_store %arg6[%32, %c0_17, %c0_18], %35 {strides = array<i32>} : memref<4x8x256xf32, #tpu.memory_space<vmem>>, vector<1x8x256xf32>,
    %c1_i32 = arith.constant 1 : i32
    %36 = arith.index_cast %c1_i32 : i32 to index
    %c0_19 = arith.constant 0 : index
    %c0_20 = arith.constant 0 : index
    %37 = vector.load %arg2[%36, %c0_19, %c0_20] : memref<4x8x2xf32, #tpu.memory_space<vmem>>, vector<1x8x2xf32>
    %38 = vector.shape_cast %37 : vector<1x8x2xf32> to vector<8x2xf32>
    %39 = vector.extract_strided_slice %38 {offsets = [0, 0], sizes = [8, 1], strides = [1, 1]} : vector<8x2xf32> to vector<8x1xf32>
    %40 = vector.broadcast %39 : vector<8x1xf32> to vector<8x256xf32>
    %41 = vector.broadcast %4 : vector<1x256xf32> to vector<8x256xf32>
    %42 = arith.mulf %40, %41 : vector<8x256xf32>
    %43 = vector.extract_strided_slice %38 {offsets = [0, 1], sizes = [8, 1], strides = [1, 1]} : vector<8x2xf32> to vector<8x1xf32>
    %44 = vector.broadcast %43 : vector<8x1xf32> to vector<8x256xf32>
    %45 = vector.broadcast %5 : vector<1x256xf32> to vector<8x256xf32>
    %46 = arith.mulf %44, %45 : vector<8x256xf32>
    %47 = arith.addf %42, %46 : vector<8x256xf32>
    %cst_21 = arith.constant dense<0.000000e+00> : vector<8x256xf32>
    %48 = tpu.matmul %31, %3, %cst_21 {dimension_numbers = #tpu.dot_dimension_numbers<[1], [0], [0], [1], [0, 0, 1, 1], [], []>} : vector<8x256xf32>, vector<256x256xf32>, vector<8x256xf32> -> vector<8x256xf32>
    %49 = arith.addf %47, %48 : vector<8x256xf32>
    %cst_22 = arith.constant 5.000000e-01 : f32
    %50 = vector.broadcast %cst_22 : f32 to vector<8x256xf32>
    %51 = arith.mulf %50, %29 : vector<8x256xf32>
    %52 = arith.subf %49, %51 : vector<8x256xf32>
    %53 = arith.subf %25, %29 : vector<8x256xf32>
    %cst_23 = arith.constant 3.000000e-01 : f32
    %54 = vector.broadcast %cst_23 : f32 to vector<8x256xf32>
    %55 = arith.mulf %54, %53 : vector<8x256xf32>
    %56 = arith.addf %29, %55 : vector<8x256xf32>
    %cst_24 = arith.constant 0.000000e+00 : f32
    %57 = vector.broadcast %cst_24 : f32 to vector<8x256xf32>
    %58 = arith.maximumf %52, %57 : vector<8x256xf32>
    %59 = arith.index_cast %c1_i32 : i32 to index
    %c0_25 = arith.constant 0 : index
    %c0_26 = arith.constant 0 : index
    %60 = vector.load %arg6[%59, %c0_25, %c0_26] : memref<4x8x256xf32, #tpu.memory_space<vmem>>, vector<1x8x256xf32>
    %61 = vector.shape_cast %60 : vector<1x8x256xf32> to vector<8x256xf32>
    %62 = vector.shape_cast %58 : vector<8x256xf32> to vector<1x8x256xf32>
    tpu.vector_store %arg6[%59, %c0_25, %c0_26], %62 {strides = array<i32>} : memref<4x8x256xf32, #tpu.memory_space<vmem>>, vector<1x8x256xf32>,
    %c2_i32 = arith.constant 2 : i32
    %63 = arith.index_cast %c2_i32 : i32 to index
    %c0_27 = arith.constant 0 : index
    %c0_28 = arith.constant 0 : index
    %64 = vector.load %arg2[%63, %c0_27, %c0_28] : memref<4x8x2xf32, #tpu.memory_space<vmem>>, vector<1x8x2xf32>
    %65 = vector.shape_cast %64 : vector<1x8x2xf32> to vector<8x2xf32>
    %66 = vector.extract_strided_slice %65 {offsets = [0, 0], sizes = [8, 1], strides = [1, 1]} : vector<8x2xf32> to vector<8x1xf32>
    %67 = vector.broadcast %66 : vector<8x1xf32> to vector<8x256xf32>
    %68 = vector.broadcast %4 : vector<1x256xf32> to vector<8x256xf32>
    %69 = arith.mulf %67, %68 : vector<8x256xf32>
    %70 = vector.extract_strided_slice %65 {offsets = [0, 1], sizes = [8, 1], strides = [1, 1]} : vector<8x2xf32> to vector<8x1xf32>
    %71 = vector.broadcast %70 : vector<8x1xf32> to vector<8x256xf32>
    %72 = vector.broadcast %5 : vector<1x256xf32> to vector<8x256xf32>
    %73 = arith.mulf %71, %72 : vector<8x256xf32>
    %74 = arith.addf %69, %73 : vector<8x256xf32>
    %cst_29 = arith.constant dense<0.000000e+00> : vector<8x256xf32>
    %75 = tpu.matmul %58, %3, %cst_29 {dimension_numbers = #tpu.dot_dimension_numbers<[1], [0], [0], [1], [0, 0, 1, 1], [], []>} : vector<8x256xf32>, vector<256x256xf32>, vector<8x256xf32> -> vector<8x256xf32>
    %76 = arith.addf %74, %75 : vector<8x256xf32>
    %cst_30 = arith.constant 5.000000e-01 : f32
    %77 = vector.broadcast %cst_30 : f32 to vector<8x256xf32>
    %78 = arith.mulf %77, %56 : vector<8x256xf32>
    %79 = arith.subf %76, %78 : vector<8x256xf32>
    %80 = arith.subf %52, %56 : vector<8x256xf32>
    %cst_31 = arith.constant 3.000000e-01 : f32
    %81 = vector.broadcast %cst_31 : f32 to vector<8x256xf32>
    %82 = arith.mulf %81, %80 : vector<8x256xf32>
    %83 = arith.addf %56, %82 : vector<8x256xf32>
    %cst_32 = arith.constant 0.000000e+00 : f32
    %84 = vector.broadcast %cst_32 : f32 to vector<8x256xf32>
    %85 = arith.maximumf %79, %84 : vector<8x256xf32>
    %86 = arith.index_cast %c2_i32 : i32 to index
    %c0_33 = arith.constant 0 : index
    %c0_34 = arith.constant 0 : index
    %87 = vector.load %arg6[%86, %c0_33, %c0_34] : memref<4x8x256xf32, #tpu.memory_space<vmem>>, vector<1x8x256xf32>
    %88 = vector.shape_cast %87 : vector<1x8x256xf32> to vector<8x256xf32>
    %89 = vector.shape_cast %85 : vector<8x256xf32> to vector<1x8x256xf32>
    tpu.vector_store %arg6[%86, %c0_33, %c0_34], %89 {strides = array<i32>} : memref<4x8x256xf32, #tpu.memory_space<vmem>>, vector<1x8x256xf32>,
    %c3_i32 = arith.constant 3 : i32
    %90 = arith.index_cast %c3_i32 : i32 to index
    %c0_35 = arith.constant 0 : index
    %c0_36 = arith.constant 0 : index
    %91 = vector.load %arg2[%90, %c0_35, %c0_36] : memref<4x8x2xf32, #tpu.memory_space<vmem>>, vector<1x8x2xf32>
    %92 = vector.shape_cast %91 : vector<1x8x2xf32> to vector<8x2xf32>
    %93 = vector.extract_strided_slice %92 {offsets = [0, 0], sizes = [8, 1], strides = [1, 1]} : vector<8x2xf32> to vector<8x1xf32>
    %94 = vector.broadcast %93 : vector<8x1xf32> to vector<8x256xf32>
    %95 = vector.broadcast %4 : vector<1x256xf32> to vector<8x256xf32>
    %96 = arith.mulf %94, %95 : vector<8x256xf32>
    %97 = vector.extract_strided_slice %92 {offsets = [0, 1], sizes = [8, 1], strides = [1, 1]} : vector<8x2xf32> to vector<8x1xf32>
    %98 = vector.broadcast %97 : vector<8x1xf32> to vector<8x256xf32>
    %99 = vector.broadcast %5 : vector<1x256xf32> to vector<8x256xf32>
    %100 = arith.mulf %98, %99 : vector<8x256xf32>
    %101 = arith.addf %96, %100 : vector<8x256xf32>
    %cst_37 = arith.constant dense<0.000000e+00> : vector<8x256xf32>
    %102 = tpu.matmul %85, %3, %cst_37 {dimension_numbers = #tpu.dot_dimension_numbers<[1], [0], [0], [1], [0, 0, 1, 1], [], []>} : vector<8x256xf32>, vector<256x256xf32>, vector<8x256xf32> -> vector<8x256xf32>
    %103 = arith.addf %101, %102 : vector<8x256xf32>
    %cst_38 = arith.constant 5.000000e-01 : f32
    %104 = vector.broadcast %cst_38 : f32 to vector<8x256xf32>
    %105 = arith.mulf %104, %83 : vector<8x256xf32>
    %106 = arith.subf %103, %105 : vector<8x256xf32>
    %107 = arith.subf %79, %83 : vector<8x256xf32>
    %cst_39 = arith.constant 3.000000e-01 : f32
    %108 = vector.broadcast %cst_39 : f32 to vector<8x256xf32>
    %109 = arith.mulf %108, %107 : vector<8x256xf32>
    %110 = arith.addf %83, %109 : vector<8x256xf32>
    %cst_40 = arith.constant 0.000000e+00 : f32
    %111 = vector.broadcast %cst_40 : f32 to vector<8x256xf32>
    %112 = arith.maximumf %106, %111 : vector<8x256xf32>
    %113 = arith.index_cast %c3_i32 : i32 to index
    %c0_41 = arith.constant 0 : index
    %c0_42 = arith.constant 0 : index
    %114 = vector.load %arg6[%113, %c0_41, %c0_42] : memref<4x8x256xf32, #tpu.memory_space<vmem>>, vector<1x8x256xf32>
    %115 = vector.shape_cast %114 : vector<1x8x256xf32> to vector<8x256xf32>
    %116 = vector.shape_cast %112 : vector<8x256xf32> to vector<1x8x256xf32>
    tpu.vector_store %arg6[%113, %c0_41, %c0_42], %116 {strides = array<i32>} : memref<4x8x256xf32, #tpu.memory_space<vmem>>, vector<1x8x256xf32>,
    %c4_i32 = arith.constant 4 : i32
    %c0_43 = arith.constant 0 : index
    %c0_44 = arith.constant 0 : index
    %117 = vector.load %arg7[%c0_43, %c0_44] : memref<8x256xf32, #tpu.memory_space<vmem>>, vector<8x256xf32>
    tpu.vector_store %arg7[%c0_43, %c0_44], %112 {strides = array<i32>} : memref<8x256xf32, #tpu.memory_space<vmem>>, vector<8x256xf32>,
    %c0_45 = arith.constant 0 : index
    %c0_46 = arith.constant 0 : index
    %118 = vector.load %arg8[%c0_45, %c0_46] : memref<8x256xf32, #tpu.memory_space<vmem>>, vector<8x256xf32>
    tpu.vector_store %arg8[%c0_45, %c0_46], %106 {strides = array<i32>} : memref<8x256xf32, #tpu.memory_space<vmem>>, vector<8x256xf32>,
    %c0_47 = arith.constant 0 : index
    %c0_48 = arith.constant 0 : index
    %119 = vector.load %arg9[%c0_47, %c0_48] : memref<8x256xf32, #tpu.memory_space<vmem>>, vector<8x256xf32>
    tpu.vector_store %arg9[%c0_47, %c0_48], %110 {strides = array<i32>} : memref<8x256xf32, #tpu.memory_space<vmem>>, vector<8x256xf32>,
    return
  }
  func.func @transform_0(%arg0: i32, %arg1: i32) -> (i32, i32, i32) {
    %c0_i32 = arith.constant 0 : i32
    %c0_i32_0 = arith.constant 0 : i32
    return %arg1, %arg0, %c0_i32 : i32, i32, i32
  }
  func.func @transform_1(%arg0: i32, %arg1: i32) -> (i32, i32) {
    %c0_i32 = arith.constant 0 : i32
    %c0_i32_0 = arith.constant 0 : i32
    %c0_i32_1 = arith.constant 0 : i32
    return %c0_i32, %c0_i32_0 : i32, i32
  }
  func.func @transform_4(%arg0: i32, %arg1: i32) -> (i32, i32, i32) {
    %c0_i32 = arith.constant 0 : i32
    %c0_i32_0 = arith.constant 0 : i32
    return %arg1, %arg0, %c0_i32 : i32, i32, i32
  }
}

</mosaic_0001>

<llo_original>
// kernel: tpu_custom_call.1
$region0: #{tpu_custom_call.1}
  #allocation0 [shape = 'u32[]', space=smem, size = 0x4, offset = 0x4, fixed_abs, tag = 'smem constant byte address 0x4 - core index']
  #allocation1 [shape = 'u32[144,128]{1,0:T(1,128)}', space=vmem, size = 0x12000, scoped, tag = 'internal scratch']
  #allocation2 [shape = 'f32[8,256]{1,0:T(8,128)}', space=vmem, size = 0x2000, scoped, tag = 'scratch operand']
  #allocation3 [shape = 'f32[8,256]{1,0:T(8,128)}', space=vmem, size = 0x2000, scoped, tag = 'scratch operand']
  #allocation4 [shape = 'f32[8,256]{1,0:T(8,128)}', space=vmem, size = 0x2000, scoped, tag = 'scratch operand']
  #allocation5 [shape = 'f32[256,256]{1,0:T(8,128)}', space=vmem, size = 0x40000, scoped, tag = 'scratch operand']
  #allocation6 [shape = 's32[2]{0}', space=sflag, size = 0x8, scoped, tag = 'scratch operand']
  #allocation13 [shape = 's32[]', space=sflag, size = 0x4, offset = 0, fixed_abs, tag = 'sflag constant byte address 0x0 - dummy sync flag']
  #allocation14 [shape = 's32[]', space=sflag, size = 0x4, offset = 0, fixed_abs, tag = 'sflag constant byte address 0x0 - dummy sync flag']
  #allocation15 [shape = 'u32[]', space=smem, size = 0x4, offset = 0x44, fixed_abs, tag = 'smem constant byte address 0x44 - assertion arg 0']
  #allocation16 [shape = 'u32[]', space=smem, size = 0x4, offset = 0x48, fixed_abs, tag = 'smem constant byte address 0x48 - assertion arg 1']
  #allocation17 [shape = 's32[]', space=sflag, size = 0x4, offset = 0, fixed_abs, tag = 'sflag constant byte address 0x0 - dummy sync flag']
  #allocation18 [shape = 's32[]', space=sflag, size = 0x4, offset = 0, fixed_abs, tag = 'sflag constant byte address 0x0 - dummy sync flag']
  %s0 = inlined_call_operand.hbm [shape: f32[8,8,2], index: 0, kind: input, shape index: {}]
  %s1 = inlined_call_operand.hbm [shape: f32[2,256], index: 1, kind: input, shape index: {}]
  %s2 = inlined_call_operand.hbm [shape: f32[256,256], index: 2, kind: input, shape index: {}]
  %s3 = inlined_call_operand.hbm [shape: f32[8,256], index: 3, kind: input, shape index: {}]
  %s4 = inlined_call_operand.hbm [shape: f32[8,8,256], index: 4, kind: output, shape index: {}]
  %s5 = sld [smem:[#allocation0]]
  $region61: #{tpu_custom_call.1} parent=0
    _
  %s7 = ssub.s32 1, %s5
  %s8 = scalar_select 0, %s7, %s5
  $region1: #{tpu_custom_call.1} parent=0
    #allocation7 [shape = 'u8[32768]{0}', space=vmem, size = 0x8000, scoped, tag = 'input window, operand 0']
    #allocation8 [shape = 's32[2]{0}', space=sflag, size = 0x8, scoped, tag = 'scoped memory for tpu_custom_call.1']
    #allocation9 [shape = 's32[2]{0}', space=sflag, size = 0x8, scoped, tag = 'scoped memory for tpu_custom_call.1']
    #allocation10 [shape = 'u8[2048]{0}', space=vmem, size = 0x800, scoped, tag = 'input window, operand 1, single buffered']
    #allocation11 [shape = 's32[1]{0}', space=sflag, size = 0x4, scoped, tag = 'scoped memory for tpu_custom_call.1']
    #allocation12 [shape = 'u8[65536]{0}', space=vmem, size = 0x10000, scoped, tag = 'output window, operand 0']
    %9 = vsyncpa [#allocation8], 0
    %s10 = scalar_lea.sflag [#allocation8], 1
    %11 = vsyncpa %s10, 0
    %12 = vsyncpa [#allocation11], 0
    %13 = vsyncpa [#allocation9], 0
    %s14 = scalar_lea.sflag [#allocation9], 1
    %15 = vsyncpa %s14, 0
    loop: start=0, step=1, limit=4
    $region2: #{tpu_custom_call.1} parent=1 // loop_pre_header
      _
    $region3: #{tpu_custom_call.1} parent=1 // loop_header
      %s17 = sphi 0, %s21
      %p18 = scmp.ge.s32.totalorder %s17, 4
      %s24 = sphi 0, %s36
      %s25 = sphi 0, %s32
      %s26 = sphi 0, %s24
      %s27 = sphi 0, %s25
      %s28 = sphi 0, %s26
      %s29 = sphi 0, %s27
      %s41 = sphi 0, %s43
      %s44 = sphi 0, %s41
      %s45 = sphi 0, %s44
      %s61 = sphi 0, %s45
      %s65 = sphi 0, %s65
      %s67 = sphi 0, %s65
      %s68 = sphi 0, %s67
      %s82 = sphi 0, %s68
      %s90 = sphi 0, %s92
      %s93 = sphi 0, %s90
      %s94 = sphi 0, %s93
      %s110 = sphi 0, %s94
    $region4: #{tpu_custom_call.1} parent=1 // loop_header_branch
      %20 = sbr.rel (%p18) target = $region8
    $region5: #{tpu_custom_call.1} parent=1 // loop_body
      %s22 = ssub.s32 %s17, 1
      %s23 = ssub.s32 %s17, 2
      %s30 = sadd.s32 1, %s25
      %p31 = scmp.ge.s32.totalorder %s30, 2
      %s32 = scalar_select %p31, 0, %s30
      %s33 = sadd.s32 1, %s24
      %s34 = scalar_select %p31, %s33, %s24
      %p35 = scmp.ge.s32.totalorder %s34, 1
      %s36 = scalar_select %p35, 0, %s34
      %s37 = ssub.s32 %s25, %s32
      %s38 = ssub.s32 %s24, %s36
      %s39 = sor.u32 %s37, %s38
      %p40 = scmp.eq.s32.totalorder %s39, 0
      %s42 = sadd.s32 %s41, 1
      %s43 = scalar_select %p40, %s41, %s42
      %p46 = pneg %p40
      %p47 = scmp.eq.s32.totalorder %s17, 1
      %p48 = por %p46, %p47
      %p49 = scmp.ne.s32.totalorder %s41, %s44
      %p50 = scmp.eq.s32.totalorder %s17, 0
      %p51 = por %p49, %p50
      %p52 = scmp.ne.s32.totalorder %s41, %s44
      %p53 = scmp.eq.s32.totalorder %s22, 1
      %p54 = por %p52, %p53
      %p55 = scmp.ne.s32.totalorder %s44, %s45
      %p56 = scmp.eq.s32.totalorder %s22, 0
      %p57 = por %p55, %p56
      %p58 = scmp.ne.s32.totalorder %s44, %s45
      %p59 = scmp.eq.s32.totalorder %s23, 1
      %p60 = por %p58, %p59
      %p62 = scmp.ne.s32.totalorder %s45, %s61
      %p63 = scmp.eq.s32.totalorder %s23, 0
      %p64 = por %p62, %p63
      %s66 = sadd.s32 %s65, 1
      %p69 = scmp.eq.s32.totalorder %s17, 1
      %p70 = scmp.ne.s32.totalorder %s65, %s67
      %p71 = scmp.eq.s32.totalorder %s17, 0
      %p72 = por %p70, %p71
      %p73 = scmp.ne.s32.totalorder %s65, %s67
      %p74 = scmp.eq.s32.totalorder %s22, 1
      %p75 = por %p73, %p74
      %p76 = scmp.ne.s32.totalorder %s67, %s68
      %p77 = scmp.eq.s32.totalorder %s22, 0
      %p78 = por %p76, %p77
      %p79 = scmp.ne.s32.totalorder %s67, %s68
      %p80 = scmp.eq.s32.totalorder %s23, 1
      %p81 = por %p79, %p80
      %p83 = scmp.ne.s32.totalorder %s68, %s82
      %p84 = scmp.eq.s32.totalorder %s23, 0
      %p85 = por %p83, %p84
      %s86 = ssub.s32 %s25, %s32
      %s87 = ssub.s32 %s24, %s36
      %s88 = sor.u32 %s86, %s87
      %p89 = scmp.eq.s32.totalorder %s88, 0
      %s91 = sadd.s32 %s90, 1
      %s92 = scalar_select %p89, %s90, %s91
      %p95 = pneg %p89
      %p96 = scmp.eq.s32.totalorder %s17, 1
      %p97 = por %p95, %p96
      %p98 = scmp.ne.s32.totalorder %s90, %s93
      %p99 = scmp.eq.s32.totalorder %s17, 0
      %p100 = por %p98, %p99
      %p101 = scmp.ne.s32.totalorder %s90, %s93
      %p102 = scmp.eq.s32.totalorder %s22, 1
      %p103 = por %p101, %p102
      %p104 = scmp.ne.s32.totalorder %s93, %s94
      %p105 = scmp.eq.s32.totalorder %s22, 0
      %p106 = por %p104, %p105
      %p107 = scmp.ne.s32.totalorder %s93, %s94
      %p108 = scmp.eq.s32.totalorder %s23, 1
      %p109 = por %p107, %p108
      %p111 = scmp.ne.s32.totalorder %s94, %s110
      %p112 = scmp.eq.s32.totalorder %s23, 0
      %p113 = por %p111, %p112
      %p114 = scmp.le.s32.totalorder 1, %s17
      %p115 = scmp.lt.s32.totalorder %s17, 3
      %p116 = pnand %p114, %p115
      %p117 = pneg %p116
      // Predicated region
      $region9: #{tpu_custom_call.1} parent=5 // pred_check
        _
      $region10: #{tpu_custom_call.1} parent=5 // pred_check_branch
        %119 = sbr.rel (%p116) target = $region12
      $region11: #{tpu_custom_call.1} parent=5 // pred_region
        %s120 = ssub.s32 %s17, 1
        // Predicated region
        $region13: #{tpu_custom_call.1} parent=11 // pred_check
          %p121 = pneg %p78
        $region14: #{tpu_custom_call.1} parent=11 // pred_check_branch
          %123 = sbr.rel (%p121) target = $region16
        $region15: #{tpu_custom_call.1} parent=11 // pred_region
          %s125 = ssub.s32 64, 64
          %126 = vsyncadd [#allocation11], %s125
          %s128 = sshll.u32 [#allocation10], 4
          %s129 = int_to_ptr.vmem [resolvable:$true] %s128
          %131 = dma.hbm_to_vmem [thread:$0]  %s1, 64, %s129, [#allocation11]
        $region16: #{tpu_custom_call.1} parent=11 // pred_fallthru
          _
      $region12: #{tpu_custom_call.1} parent=5 // pred_fallthru
        _
      %p132 = scmp.lt.s32.totalorder %s17, 2
      // Predicated region
      $region17: #{tpu_custom_call.1} parent=5 // pred_check
        %p133 = pneg %p132
      $region18: #{tpu_custom_call.1} parent=5 // pred_check_branch
        %135 = sbr.rel (%p133) target = $region20
      $region19: #{tpu_custom_call.1} parent=5 // pred_region
        // Predicated region
        $region21: #{tpu_custom_call.1} parent=19 // pred_check
          %p136 = pneg %p51
        $region22: #{tpu_custom_call.1} parent=19 // pred_check_branch
          %138 = sbr.rel (%p136) target = $region24
        $region23: #{tpu_custom_call.1} parent=19 // pred_region
          %s139 = sand.u32 %s41, 1
          %s140 = scalar_lea.sflag [#allocation8], %s139
          %s141 = sand.u32 %s41, 1
          %s142 = smul.addr %s141, 32
          %s143 = scalar_lea.vmem [#allocation7], %s142
          %s144 = smul.u32 4, %s25
          %s146 = ssub.s32 512, 512
          %147 = vsyncadd %s140, %s146
          %s148 = sadd.s32 %s24, %s144
          %s149 = smul.addr %s148, 128
          %s150 = scalar_lea.hbm %s0, %s149
          %s151 = sshll.u32 %s143, 4
          %s152 = int_to_ptr.vmem [resolvable:$true] %s151
          %157 = dma.hbm_to_vmem [thread:$0]  %s150, 512, %s152, %s140, 128, 128, 8
        $region24: #{tpu_custom_call.1} parent=19 // pred_fallthru
          _
      $region20: #{tpu_custom_call.1} parent=5 // pred_fallthru
        _
      %p158 = scmp.le.s32.totalorder 1, %s17
      %p159 = scmp.lt.s32.totalorder %s17, 3
      %p160 = pnand %p158, %p159
      %p161 = pneg %p160
      // Predicated region
      $region25: #{tpu_custom_call.1} parent=5 // pred_check
        _
      $region26: #{tpu_custom_call.1} parent=5 // pred_check_branch
        %163 = sbr.rel (%p160) target = $region28
      $region27: #{tpu_custom_call.1} parent=5 // pred_region
        %s164 = ssub.s32 %s17, 1
        %s165 = sand.u32 %s44, 1
        %s166 = scalar_lea.sflag [#allocation8], %s165
        %s167 = sand.u32 %s44, 1
        %s168 = smul.addr %s167, 32
        %s169 = scalar_lea.vmem [#allocation7], %s168
        // Predicated region
        $region29: #{tpu_custom_call.1} parent=27 // pred_check
          %p170 = pneg %p57
        $region30: #{tpu_custom_call.1} parent=27 // pred_check_branch
          %172 = sbr.rel (%p170) target = $region32
        $region31: #{tpu_custom_call.1} parent=27 // pred_region
          %173 = dma.done %s166, 512
        $region32: #{tpu_custom_call.1} parent=27 // pred_fallthru
          _
        // Predicated region
        $region33: #{tpu_custom_call.1} parent=27 // pred_check
          %p174 = pneg %p78
        $region34: #{tpu_custom_call.1} parent=27 // pred_check_branch
          %176 = sbr.rel (%p174) target = $region36
        $region35: #{tpu_custom_call.1} parent=27 // pred_region
          %177 = dma.done [#allocation11], 64
        $region36: #{tpu_custom_call.1} parent=27 // pred_fallthru
          _
        %s178 = sand.u32 %s44, 1
        %s179 = scalar_lea.sflag [#allocation8], %s178
        %s180 = sand.u32 %s44, 1
        %s181 = smul.addr %s180, 32
        %s182 = scalar_lea.vmem [#allocation7], %s181
        %p183 = pneg %p57
        %p184 = pneg %p54
        %p185 = pneg %p78
        %p186 = pneg %p75
        %p187 = pneg %p106
        %p188 = pneg %p103
        %s189 = sand.u32 %s93, 1
        %s190 = scalar_lea.sflag [#allocation9], %s189
        %s191 = sand.u32 %s93, 1
        %s192 = smul.addr %s191, 64
        %s193 = scalar_lea.vmem [#allocation12], %s192
        %s194 = smul.u32 4, %s27
        %s195 = smul.u32 4, %s27
        %p196 = scmp.eq.s32.totalorder %s27, 0
        // Predicated region
        $region37: #{tpu_custom_call.1} parent=27 // pred_check
          %p197 = pneg %p196
        $region38: #{tpu_custom_call.1} parent=27 // pred_check_branch
          %199 = sbr.rel (%p197) target = $region40
        $region39: #{tpu_custom_call.1} parent=27 // pred_region
          // Predicated region
          $region41: #{tpu_custom_call.1} parent=39 // pred_check
            _
          $region42: #{tpu_custom_call.1} parent=39 // pred_check_branch
            %201 = sbr.rel target = $region44
          $region43: #{tpu_custom_call.1} parent=39 // pred_region
            %202 = sst [smem:[#allocation15]] [#allocation14]
            %203 = sst [smem:[#allocation16]] [#allocation13]
          $region44: #{tpu_custom_call.1} parent=39 // pred_fallthru
            _
          %205 = shalt.err (0)
          %s207 = sshll.u32 [#allocation5], 4
          %s208 = int_to_ptr.vmem [resolvable:$true] %s207
          %210 = dma.hbm_to_vmem [thread:$0]  %s2, 8192, %s208, [#allocation6]
          %s211 = smul.u32 %s26, 8
          %s212 = sshra.s32 %s211, 3
          %s213 = sand.u32 %s211, 7
          %s214 = smul.u32 %s212, 2
          %s215 = smul.addr %s214, 128
          %s216 = scalar_lea.hbm %s3, %s215
          %s217 = scalar_lea.sflag [#allocation6], 1
          // Predicated region
          $region45: #{tpu_custom_call.1} parent=39 // pred_check
            _
          $region46: #{tpu_custom_call.1} parent=39 // pred_check_branch
            %219 = sbr.rel target = $region48
          $region47: #{tpu_custom_call.1} parent=39 // pred_region
            %220 = sst [smem:[#allocation15]] [#allocation18]
            %221 = sst [smem:[#allocation16]] [#allocation17]
          $region48: #{tpu_custom_call.1} parent=39 // pred_fallthru
            _
          %223 = shalt.err (0)
          %s225 = sshll.u32 [#allocation2], 4
          %s226 = int_to_ptr.vmem [resolvable:$true] %s225
          %228 = dma.hbm_to_vmem [thread:$0]  %s216, 256, %s226, %s217
          %229 = vst [vmem:[#allocation3] sm:$0xff] 0.0
          %230 = vst [vmem:[#allocation3 + $0x8] sm:$0xff] 0.0
          %231 = vst [vmem:[#allocation4] sm:$0xff] 0.0
          %232 = vst [vmem:[#allocation4 + $0x8] sm:$0xff] 0.0
          %s233 = smul.u32 8, 32
          %s234 = smul.u32 %s233, 2
          %s235 = sshll.u32 %s234, 4
          %236 = dma.done [#allocation6], %s235
          %s237 = smul.u32 8, 1
          %s238 = smul.u32 %s237, 2
          %s239 = sshll.u32 %s238, 4
          %240 = dma.done %s217, %s239
        $region40: #{tpu_custom_call.1} parent=27 // pred_fallthru
          _
        %v241 = vld [vmem:[#allocation5] sm:$0xff]
        %v242 = vld [vmem:[#allocation5 + $0x8] sm:$0xff]
        %v243 = vld [vmem:[#allocation5 + $0x10] sm:$0xff]
        %v244 = vld [vmem:[#allocation5 + $0x18] sm:$0xff]
        %v245 = vld [vmem:[#allocation5 + $0x20] sm:$0xff]
        %v246 = vld [vmem:[#allocation5 + $0x28] sm:$0xff]
        %v247 = vld [vmem:[#allocation5 + $0x30] sm:$0xff]
        %v248 = vld [vmem:[#allocation5 + $0x38] sm:$0xff]
        %v249 = vld [vmem:[#allocation5 + $0x40] sm:$0xff]
        %v250 = vld [vmem:[#allocation5 + $0x48] sm:$0xff]
        %v251 = vld [vmem:[#allocation5 + $0x50] sm:$0xff]
        %v252 = vld [vmem:[#allocation5 + $0x58] sm:$0xff]
        %v253 = vld [vmem:[#allocation5 + $0x60] sm:$0xff]
        %v254 = vld [vmem:[#allocation5 + $0x68] sm:$0xff]
        %v255 = vld [vmem:[#allocation5 + $0x70] sm:$0xff]
        %v256 = vld [vmem:[#allocation5 + $0x78] sm:$0xff]
        %v257 = vld [vmem:[#allocation5 + $0x80] sm:$0xff]
        %v258 = vld [vmem:[#allocation5 + $0x88] sm:$0xff]
        %v259 = vld [vmem:[#allocation5 + $0x90] sm:$0xff]
        %v260 = vld [vmem:[#allocation5 + $0x98] sm:$0xff]
        %v261 = vld [vmem:[#allocation5 + $0xa0] sm:$0xff]
        %v262 = vld [vmem:[#allocation5 + $0xa8] sm:$0xff]
        %v263 = vld [vmem:[#allocation5 + $0xb0] sm:$0xff]
        %v264 = vld [vmem:[#allocation5 + $0xb8] sm:$0xff]
        %v265 = vld [vmem:[#allocation5 + $0xc0] sm:$0xff]
        %v266 = vld [vmem:[#allocation5 + $0xc8] sm:$0xff]
        %v267 = vld [vmem:[#allocation5 + $0xd0] sm:$0xff]
        %v268 = vld [vmem:[#allocation5 + $0xd8] sm:$0xff]
        %v269 = vld [vmem:[#allocation5 + $0xe0] sm:$0xff]
        %v270 = vld [vmem:[#allocation5 + $0xe8] sm:$0xff]
        %v271 = vld [vmem:[#allocation5 + $0xf0] sm:$0xff]
        %v272 = vld [vmem:[#allocation5 + $0xf8] sm:$0xff]
        %v273 = vld [vmem:[#allocation5 + $0x100] sm:$0xff]
        %v274 = vld [vmem:[#allocation5 + $0x108] sm:$0xff]
        %v275 = vld [vmem:[#allocation5 + $0x110] sm:$0xff]
        %v276 = vld [vmem:[#allocation5 + $0x118] sm:$0xff]
        %v277 = vld [vmem:[#allocation5 + $0x120] sm:$0xff]
        %v278 = vld [vmem:[#allocation5 + $0x128] sm:$0xff]
        %v279 = vld [vmem:[#allocation5 + $0x130] sm:$0xff]
        %v280 = vld [vmem:[#allocation5 + $0x138] sm:$0xff]
        %v281 = vld [vmem:[#allocation5 + $0x140] sm:$0xff]
        %v282 = vld [vmem:[#allocation5 + $0x148] sm:$0xff]
        %v283 = vld [vmem:[#allocation5 + $0x150] sm:$0xff]
        %v284 = vld [vmem:[#allocation5 + $0x158] sm:$0xff]
        %v285 = vld [vmem:[#allocation5 + $0x160] sm:$0xff]
        %v286 = vld [vmem:[#allocation5 + $0x168] sm:$0xff]
        %v287 = vld [vmem:[#allocation5 + $0x170] sm:$0xff]
        %v288 = vld [vmem:[#allocation5 + $0x178] sm:$0xff]
        %v289 = vld [vmem:[#allocation5 + $0x180] sm:$0xff]
        %v290 = vld [vmem:[#allocation5 + $0x188] sm:$0xff]
        %v291 = vld [vmem:[#allocation5 + $0x190] sm:$0xff]
        %v292 = vld [vmem:[#allocation5 + $0x198] sm:$0xff]
        %v293 = vld [vmem:[#allocation5 + $0x1a0] sm:$0xff]
        %v294 = vld [vmem:[#allocation5 + $0x1a8] sm:$0xff]
        %v295 = vld [vmem:[#allocation5 + $0x1b0] sm:$0xff]
        %v296 = vld [vmem:[#allocation5 + $0x1b8] sm:$0xff]
        %v297 = vld [vmem:[#allocation5 + $0x1c0] sm:$0xff]
        %v298 = vld [vmem:[#allocation5 + $0x1c8] sm:$0xff]
        %v299 = vld [vmem:[#allocation5 + $0x1d0] sm:$0xff]
        %v300 = vld [vmem:[#allocation5 + $0x1d8] sm:$0xff]
        %v301 = vld [vmem:[#allocation5 + $0x1e0] sm:$0xff]
        %v302 = vld [vmem:[#allocation5 + $0x1e8] sm:$0xff]
        %v303 = vld [vmem:[#allocation5 + $0x1f0] sm:$0xff]
        %v304 = vld [vmem:[#allocation5 + $0x1f8] sm:$0xff]
        %v305 = vld [vmem:[#allocation10] ss:$2 sm:$0x3]
        %s306 = scalar_lea.vmem [#allocation10], 1
        %v307 = vld [vmem:[%s306] ss:$2 sm:$0x3]
        %v308 = vld [vmem:[#allocation2] sm:$0xff]
        %v309 = vld [vmem:[#allocation2 + $0x8] sm:$0xff]
        %v310 = vld [vmem:[#allocation3] sm:$0xff]
        %v311 = vld [vmem:[#allocation3 + $0x8] sm:$0xff]
        %v312 = vld [vmem:[#allocation4] sm:$0xff]
        %v313 = vld [vmem:[#allocation4 + $0x8] sm:$0xff]
        %v314 = vld [vmem:[%s169] sm:$0xff]
        %316 = vset.pattern.permute.xlu0 0
        %317 = vperm.xlu0 %316, %v314
        %v318 = vpop.permute.xlu0 %317
        %v321 = vlaneseq
        %v322 = vshrl.u32 %v321, 7
        %v323 = vsub.s32 0, %v322
        %v324 = vrot.slane %v305, %v323
        %v325 = vlaneseq
        %v326 = vshrl.u32 %v325, 7
        %v327 = vsub.s32 1, %v326
        %v328 = vrot.slane %v305, %v327
        %v331 = vmul.f32 %v318, %v324
        %v332 = vmul.f32 %v318, %v328
        %333 = vset.pattern.permute.xlu0 1
        %334 = vperm.xlu0 %333, %v314
        %v335 = vpop.permute.xlu0 %334
        %v338 = vlaneseq
        %v339 = vshrl.u32 %v338, 7
        %v340 = vsub.s32 0, %v339
        %v341 = vrot.slane %v307, %v340
        %v342 = vlaneseq
        %v343 = vshrl.u32 %v342, 7
        %v344 = vsub.s32 1, %v343
        %v345 = vrot.slane %v307, %v344
        %v348 = vmul.f32 %v335, %v341
        %v349 = vmul.f32 %v335, %v345
        %v350 = vadd.f32 %v331, %v348
        %v351 = vadd.f32 %v332, %v349
        %352 = vmatprep.subr.mxu0 %v242
        %353 = vmatpush1.msra.mxu0 %v241
        %354 = vmatprep.subr.mxu0 %v244
        %355 = vmatpush1.msra.mxu0 %v243
        %356 = vmatprep.subr.mxu0 %v246
        %357 = vmatpush1.msra.mxu0 %v245
        %358 = vmatprep.subr.mxu0 %v248
        %359 = vmatpush1.msra.mxu0 %v247
        %360 = vmatprep.subr.mxu0 %v250
        %361 = vmatpush1.msra.mxu0 %v249
        %362 = vmatprep.subr.mxu0 %v252
        %363 = vmatpush1.msra.mxu0 %v251
        %364 = vmatprep.subr.mxu0 %v254
        %365 = vmatpush1.msra.mxu0 %v253
        %366 = vmatprep.subr.mxu0 %v256
        %367 = vmatpush1.msra.mxu0 %v255
        %368 = vmatprep.subr.mxu0 %v258
        %369 = vmatpush1.msra.mxu0 %v257
        %370 = vmatprep.subr.mxu0 %v260
        %371 = vmatpush1.msra.mxu0 %v259
        %372 = vmatprep.subr.mxu0 %v262
        %373 = vmatpush1.msra.mxu0 %v261
        %374 = vmatprep.subr.mxu0 %v264
        %375 = vmatpush1.msra.mxu0 %v263
        %376 = vmatprep.subr.mxu0 %v266
        %377 = vmatpush1.msra.mxu0 %v265
        %378 = vmatprep.subr.mxu0 %v268
        %379 = vmatpush1.msra.mxu0 %v267
        %380 = vmatprep.subr.mxu0 %v270
        %381 = vmatpush1.msra.mxu0 %v269
        %382 = vmatprep.subr.mxu0 %v272
        %383 = vmatpush1.msra.mxu0 %v271
        %384 = vmatprep.subr.mxu0 %v274
        %385 = vmatpush1.msra.mxu0 %v273
        %386 = vmatprep.subr.mxu0 %v276
        %387 = vmatpush1.msra.mxu0 %v275
        %388 = vmatprep.subr.mxu0 %v278
        %389 = vmatpush1.msra.mxu0 %v277
        %390 = vmatprep.subr.mxu0 %v280
        %391 = vmatpush1.msra.mxu0 %v279
        %392 = vmatprep.subr.mxu0 %v282
        %393 = vmatpush1.msra.mxu0 %v281
        %394 = vmatprep.subr.mxu0 %v284
        %395 = vmatpush1.msra.mxu0 %v283
        %396 = vmatprep.subr.mxu0 %v286
        %397 = vmatpush1.msra.mxu0 %v285
        %398 = vmatprep.subr.mxu0 %v288
        %399 = vmatpush1.msra.mxu0 %v287
        %400 = vmatprep.subr.mxu0 %v290
        %401 = vmatpush1.msra.mxu0 %v289
        %402 = vmatprep.subr.mxu0 %v292
        %403 = vmatpush1.msra.mxu0 %v291
        %404 = vmatprep.subr.mxu0 %v294
        %405 = vmatpush1.msra.mxu0 %v293
        %406 = vmatprep.subr.mxu0 %v296
        %407 = vmatpush1.msra.mxu0 %v295
        %408 = vmatprep.subr.mxu0 %v298
        %409 = vmatpush1.msra.mxu0 %v297
        %410 = vmatprep.subr.mxu0 %v300
        %411 = vmatpush1.msra.mxu0 %v299
        %412 = vmatprep.subr.mxu0 %v302
        %413 = vmatpush1.msra.mxu0 %v301
        %414 = vmatprep.subr.mxu0 %v304
        %415 = vmatpush1.msra.mxu0 %v303
        %416 = vmatprep.mubr.f32.mxu0 %v309
        %417 = vmatmul.mubr.f32.gmra.mrb[0].mxu0 %v308
        %v418 = vpop.f32.mrb[0].mxu0
        %v419 = vadd.f32 0.0, %v418
        %v420 = vpop.f32.mrb[0].mxu0
        %v421 = vadd.f32 0.0, %v420
        %422 = vdwg.mxu0
        %v423 = vadd.f32 %v350, %v419
        %v424 = vadd.f32 %v351, %v421
        %v425 = vmul.f32 %v312, 0.5
        %v426 = vmul.f32 %v313, 0.5
        %v427 = vsub.f32 %v423, %v425
        %v428 = vsub.f32 %v424, %v426
        %v429 = vsub.f32 %v310, %v312
        %v430 = vsub.f32 %v311, %v313
        %v431 = vmul.f32 %v429, 0.3
        %v432 = vmul.f32 %v430, 0.3
        %v433 = vadd.f32 %v312, %v431
        %v434 = vadd.f32 %v313, %v432
        %v435 = vmax.f32 %v427, 0.0
        %v436 = vmax.f32 %v428, 0.0
        %437 = vst [vmem:[%s193] sm:$0xff] %v435
        %438 = vst [vmem:[%s193 + $0x8] sm:$0xff] %v436
        %s439 = scalar_lea.vmem %s169, 8 [#allocation7]
        %v440 = vld [vmem:[%s439] sm:$0xff]
        %442 = vset.pattern.permute.xlu0 0
        %443 = vperm.xlu0 %442, %v440
        %v444 = vpop.permute.xlu0 %443
        %v446 = vmul.f32 %v444, %v324
        %v447 = vmul.f32 %v444, %v328
        %448 = vset.pattern.permute.xlu0 1
        %449 = vperm.xlu0 %448, %v440
        %v450 = vpop.permute.xlu0 %449
        %v452 = vmul.f32 %v450, %v341
        %v453 = vmul.f32 %v450, %v345
        %v454 = vadd.f32 %v446, %v452
        %v455 = vadd.f32 %v447, %v453
        %456 = vmatprep.subr.mxu0 %v242
        %457 = vmatpush1.msra.mxu0 %v241
        %458 = vmatprep.subr.mxu0 %v244
        %459 = vmatpush1.msra.mxu0 %v243
        %460 = vmatprep.subr.mxu0 %v246
        %461 = vmatpush1.msra.mxu0 %v245
        %462 = vmatprep.subr.mxu0 %v248
        %463 = vmatpush1.msra.mxu0 %v247
        %464 = vmatprep.subr.mxu0 %v250
        %465 = vmatpush1.msra.mxu0 %v249
        %466 = vmatprep.subr.mxu0 %v252
        %467 = vmatpush1.msra.mxu0 %v251
        %468 = vmatprep.subr.mxu0 %v254
        %469 = vmatpush1.msra.mxu0 %v253
        %470 = vmatprep.subr.mxu0 %v256
        %471 = vmatpush1.msra.mxu0 %v255
        %472 = vmatprep.subr.mxu0 %v258
        %473 = vmatpush1.msra.mxu0 %v257
        %474 = vmatprep.subr.mxu0 %v260
        %475 = vmatpush1.msra.mxu0 %v259
        %476 = vmatprep.subr.mxu0 %v262
        %477 = vmatpush1.msra.mxu0 %v261
        %478 = vmatprep.subr.mxu0 %v264
        %479 = vmatpush1.msra.mxu0 %v263
        %480 = vmatprep.subr.mxu0 %v266
        %481 = vmatpush1.msra.mxu0 %v265
        %482 = vmatprep.subr.mxu0 %v268
        %483 = vmatpush1.msra.mxu0 %v267
        %484 = vmatprep.subr.mxu0 %v270
        %485 = vmatpush1.msra.mxu0 %v269
        %486 = vmatprep.subr.mxu0 %v272
        %487 = vmatpush1.msra.mxu0 %v271
        %488 = vmatprep.subr.mxu0 %v274
        %489 = vmatpush1.msra.mxu0 %v273
        %490 = vmatprep.subr.mxu0 %v276
        %491 = vmatpush1.msra.mxu0 %v275
        %492 = vmatprep.subr.mxu0 %v278
        %493 = vmatpush1.msra.mxu0 %v277
        %494 = vmatprep.subr.mxu0 %v280
        %495 = vmatpush1.msra.mxu0 %v279
        %496 = vmatprep.subr.mxu0 %v282
        %497 = vmatpush1.msra.mxu0 %v281
        %498 = vmatprep.subr.mxu0 %v284
        %499 = vmatpush1.msra.mxu0 %v283
        %500 = vmatprep.subr.mxu0 %v286
        %501 = vmatpush1.msra.mxu0 %v285
        %502 = vmatprep.subr.mxu0 %v288
        %503 = vmatpush1.msra.mxu0 %v287
        %504 = vmatprep.subr.mxu0 %v290
        %505 = vmatpush1.msra.mxu0 %v289
        %506 = vmatprep.subr.mxu0 %v292
        %507 = vmatpush1.msra.mxu0 %v291
        %508 = vmatprep.subr.mxu0 %v294
        %509 = vmatpush1.msra.mxu0 %v293
        %510 = vmatprep.subr.mxu0 %v296
        %511 = vmatpush1.msra.mxu0 %v295
        %512 = vmatprep.subr.mxu0 %v298
        %513 = vmatpush1.msra.mxu0 %v297
        %514 = vmatprep.subr.mxu0 %v300
        %515 = vmatpush1.msra.mxu0 %v299
        %516 = vmatprep.subr.mxu0 %v302
        %517 = vmatpush1.msra.mxu0 %v301
        %518 = vmatprep.subr.mxu0 %v304
        %519 = vmatpush1.msra.mxu0 %v303
        %520 = vmatprep.mubr.f32.mxu0 %v436
        %521 = vmatmul.mubr.f32.gmra.mrb[0].mxu0 %v435
        %v522 = vpop.f32.mrb[0].mxu0
        %v523 = vadd.f32 0.0, %v522
        %v524 = vpop.f32.mrb[0].mxu0
        %v525 = vadd.f32 0.0, %v524
        %526 = vdwg.mxu0
        %v527 = vadd.f32 %v454, %v523
        %v528 = vadd.f32 %v455, %v525
        %v529 = vmul.f32 %v433, 0.5
        %v530 = vmul.f32 %v434, 0.5
        %v531 = vsub.f32 %v527, %v529
        %v532 = vsub.f32 %v528, %v530
        %v533 = vsub.f32 %v427, %v433
        %v534 = vsub.f32 %v428, %v434
        %v535 = vmul.f32 %v533, 0.3
        %v536 = vmul.f32 %v534, 0.3
        %v537 = vadd.f32 %v433, %v535
        %v538 = vadd.f32 %v434, %v536
        %v539 = vmax.f32 %v531, 0.0
        %v540 = vmax.f32 %v532, 0.0
        %s541 = scalar_lea.vmem %s193, 16 [#allocation12]
        %542 = vst [vmem:[%s541] sm:$0xff] %v539
        %543 = vst [vmem:[%s541 + $0x8] sm:$0xff] %v540
        %s544 = scalar_lea.vmem %s169, 16 [#allocation7]
        %v545 = vld [vmem:[%s544] sm:$0xff]
        %547 = vset.pattern.permute.xlu0 0
        %548 = vperm.xlu0 %547, %v545
        %v549 = vpop.permute.xlu0 %548
        %v551 = vmul.f32 %v549, %v324
        %v552 = vmul.f32 %v549, %v328
        %553 = vset.pattern.permute.xlu0 1
        %554 = vperm.xlu0 %553, %v545
        %v555 = vpop.permute.xlu0 %554
        %v557 = vmul.f32 %v555, %v341
        %v558 = vmul.f32 %v555, %v345
        %v559 = vadd.f32 %v551, %v557
        %v560 = vadd.f32 %v552, %v558
        %561 = vmatprep.subr.mxu0 %v242
        %562 = vmatpush1.msra.mxu0 %v241
        %563 = vmatprep.subr.mxu0 %v244
        %564 = vmatpush1.msra.mxu0 %v243
        %565 = vmatprep.subr.mxu0 %v246
        %566 = vmatpush1.msra.mxu0 %v245
        %567 = vmatprep.subr.mxu0 %v248
        %568 = vmatpush1.msra.mxu0 %v247
        %569 = vmatprep.subr.mxu0 %v250
        %570 = vmatpush1.msra.mxu0 %v249
        %571 = vmatprep.subr.mxu0 %v252
        %572 = vmatpush1.msra.mxu0 %v251
        %573 = vmatprep.subr.mxu0 %v254
        %574 = vmatpush1.msra.mxu0 %v253
        %575 = vmatprep.subr.mxu0 %v256
        %576 = vmatpush1.msra.mxu0 %v255
        %577 = vmatprep.subr.mxu0 %v258
        %578 = vmatpush1.msra.mxu0 %v257
        %579 = vmatprep.subr.mxu0 %v260
        %580 = vmatpush1.msra.mxu0 %v259
        %581 = vmatprep.subr.mxu0 %v262
        %582 = vmatpush1.msra.mxu0 %v261
        %583 = vmatprep.subr.mxu0 %v264
        %584 = vmatpush1.msra.mxu0 %v263
        %585 = vmatprep.subr.mxu0 %v266
        %586 = vmatpush1.msra.mxu0 %v265
        %587 = vmatprep.subr.mxu0 %v268
        %588 = vmatpush1.msra.mxu0 %v267
        %589 = vmatprep.subr.mxu0 %v270
        %590 = vmatpush1.msra.mxu0 %v269
        %591 = vmatprep.subr.mxu0 %v272
        %592 = vmatpush1.msra.mxu0 %v271
        %593 = vmatprep.subr.mxu0 %v274
        %594 = vmatpush1.msra.mxu0 %v273
        %595 = vmatprep.subr.mxu0 %v276
        %596 = vmatpush1.msra.mxu0 %v275
        %597 = vmatprep.subr.mxu0 %v278
        %598 = vmatpush1.msra.mxu0 %v277
        %599 = vmatprep.subr.mxu0 %v280
        %600 = vmatpush1.msra.mxu0 %v279
        %601 = vmatprep.subr.mxu0 %v282
        %602 = vmatpush1.msra.mxu0 %v281
        %603 = vmatprep.subr.mxu0 %v284
        %604 = vmatpush1.msra.mxu0 %v283
        %605 = vmatprep.subr.mxu0 %v286
        %606 = vmatpush1.msra.mxu0 %v285
        %607 = vmatprep.subr.mxu0 %v288
        %608 = vmatpush1.msra.mxu0 %v287
        %609 = vmatprep.subr.mxu0 %v290
        %610 = vmatpush1.msra.mxu0 %v289
        %611 = vmatprep.subr.mxu0 %v292
        %612 = vmatpush1.msra.mxu0 %v291
        %613 = vmatprep.subr.mxu0 %v294
        %614 = vmatpush1.msra.mxu0 %v293
        %615 = vmatprep.subr.mxu0 %v296
        %616 = vmatpush1.msra.mxu0 %v295
        %617 = vmatprep.subr.mxu0 %v298
        %618 = vmatpush1.msra.mxu0 %v297
        %619 = vmatprep.subr.mxu0 %v300
        %620 = vmatpush1.msra.mxu0 %v299
        %621 = vmatprep.subr.mxu0 %v302
        %622 = vmatpush1.msra.mxu0 %v301
        %623 = vmatprep.subr.mxu0 %v304
        %624 = vmatpush1.msra.mxu0 %v303
        %625 = vmatprep.mubr.f32.mxu0 %v540
        %626 = vmatmul.mubr.f32.gmra.mrb[0].mxu0 %v539
        %v627 = vpop.f32.mrb[0].mxu0
        %v628 = vadd.f32 0.0, %v627
        %v629 = vpop.f32.mrb[0].mxu0
        %v630 = vadd.f32 0.0, %v629
        %631 = vdwg.mxu0
        %v632 = vadd.f32 %v559, %v628
        %v633 = vadd.f32 %v560, %v630
        %v634 = vmul.f32 %v537, 0.5
        %v635 = vmul.f32 %v538, 0.5
        %v636 = vsub.f32 %v632, %v634
        %v637 = vsub.f32 %v633, %v635
        %v638 = vsub.f32 %v531, %v537
        %v639 = vsub.f32 %v532, %v538
        %v640 = vmul.f32 %v638, 0.3
        %v641 = vmul.f32 %v639, 0.3
        %v642 = vadd.f32 %v537, %v640
        %v643 = vadd.f32 %v538, %v641
        %v644 = vmax.f32 %v636, 0.0
        %v645 = vmax.f32 %v637, 0.0
        %s646 = scalar_lea.vmem %s193, 32 [#allocation12]
        %647 = vst [vmem:[%s646] sm:$0xff] %v644
        %648 = vst [vmem:[%s646 + $0x8] sm:$0xff] %v645
        %s649 = scalar_lea.vmem %s169, 24 [#allocation7]
        %v650 = vld [vmem:[%s649] sm:$0xff]
        %652 = vset.pattern.permute.xlu0 0
        %653 = vperm.xlu0 %652, %v650
        %v654 = vpop.permute.xlu0 %653
        %v656 = vmul.f32 %v654, %v324
        %v657 = vmul.f32 %v654, %v328
        %658 = vset.pattern.permute.xlu0 1
        %659 = vperm.xlu0 %658, %v650
        %v660 = vpop.permute.xlu0 %659
        %v662 = vmul.f32 %v660, %v341
        %v663 = vmul.f32 %v660, %v345
        %v664 = vadd.f32 %v656, %v662
        %v665 = vadd.f32 %v657, %v663
        %666 = vmatprep.subr.mxu0 %v242
        %667 = vmatpush1.msra.mxu0 %v241
        %668 = vmatprep.subr.mxu0 %v244
        %669 = vmatpush1.msra.mxu0 %v243
        %670 = vmatprep.subr.mxu0 %v246
        %671 = vmatpush1.msra.mxu0 %v245
        %672 = vmatprep.subr.mxu0 %v248
        %673 = vmatpush1.msra.mxu0 %v247
        %674 = vmatprep.subr.mxu0 %v250
        %675 = vmatpush1.msra.mxu0 %v249
        %676 = vmatprep.subr.mxu0 %v252
        %677 = vmatpush1.msra.mxu0 %v251
        %678 = vmatprep.subr.mxu0 %v254
        %679 = vmatpush1.msra.mxu0 %v253
        %680 = vmatprep.subr.mxu0 %v256
        %681 = vmatpush1.msra.mxu0 %v255
        %682 = vmatprep.subr.mxu0 %v258
        %683 = vmatpush1.msra.mxu0 %v257
        %684 = vmatprep.subr.mxu0 %v260
        %685 = vmatpush1.msra.mxu0 %v259
        %686 = vmatprep.subr.mxu0 %v262
        %687 = vmatpush1.msra.mxu0 %v261
        %688 = vmatprep.subr.mxu0 %v264
        %689 = vmatpush1.msra.mxu0 %v263
        %690 = vmatprep.subr.mxu0 %v266
        %691 = vmatpush1.msra.mxu0 %v265
        %692 = vmatprep.subr.mxu0 %v268
        %693 = vmatpush1.msra.mxu0 %v267
        %694 = vmatprep.subr.mxu0 %v270
        %695 = vmatpush1.msra.mxu0 %v269
        %696 = vmatprep.subr.mxu0 %v272
        %697 = vmatpush1.msra.mxu0 %v271
        %698 = vmatprep.subr.mxu0 %v274
        %699 = vmatpush1.msra.mxu0 %v273
        %700 = vmatprep.subr.mxu0 %v276
        %701 = vmatpush1.msra.mxu0 %v275
        %702 = vmatprep.subr.mxu0 %v278
        %703 = vmatpush1.msra.mxu0 %v277
        %704 = vmatprep.subr.mxu0 %v280
        %705 = vmatpush1.msra.mxu0 %v279
        %706 = vmatprep.subr.mxu0 %v282
        %707 = vmatpush1.msra.mxu0 %v281
        %708 = vmatprep.subr.mxu0 %v284
        %709 = vmatpush1.msra.mxu0 %v283
        %710 = vmatprep.subr.mxu0 %v286
        %711 = vmatpush1.msra.mxu0 %v285
        %712 = vmatprep.subr.mxu0 %v288
        %713 = vmatpush1.msra.mxu0 %v287
        %714 = vmatprep.subr.mxu0 %v290
        %715 = vmatpush1.msra.mxu0 %v289
        %716 = vmatprep.subr.mxu0 %v292
        %717 = vmatpush1.msra.mxu0 %v291
        %718 = vmatprep.subr.mxu0 %v294
        %719 = vmatpush1.msra.mxu0 %v293
        %720 = vmatprep.subr.mxu0 %v296
        %721 = vmatpush1.msra.mxu0 %v295
        %722 = vmatprep.subr.mxu0 %v298
        %723 = vmatpush1.msra.mxu0 %v297
        %724 = vmatprep.subr.mxu0 %v300
        %725 = vmatpush1.msra.mxu0 %v299
        %726 = vmatprep.subr.mxu0 %v302
        %727 = vmatpush1.msra.mxu0 %v301
        %728 = vmatprep.subr.mxu0 %v304
        %729 = vmatpush1.msra.mxu0 %v303
        %730 = vmatprep.mubr.f32.mxu0 %v645
        %731 = vmatmul.mubr.f32.gmra.mrb[0].mxu0 %v644
        %v732 = vpop.f32.mrb[0].mxu0
        %v733 = vadd.f32 0.0, %v732
        %v734 = vpop.f32.mrb[0].mxu0
        %v735 = vadd.f32 0.0, %v734
        %736 = vdwg.mxu0
        %v737 = vadd.f32 %v664, %v733
        %v738 = vadd.f32 %v665, %v735
        %v739 = vmul.f32 %v642, 0.5
        %v740 = vmul.f32 %v643, 0.5
        %v741 = vsub.f32 %v737, %v739
        %v742 = vsub.f32 %v738, %v740
        %v743 = vsub.f32 %v636, %v642
        %v744 = vsub.f32 %v637, %v643
        %v745 = vmul.f32 %v743, 0.3
        %v746 = vmul.f32 %v744, 0.3
        %v747 = vadd.f32 %v642, %v745
        %v748 = vadd.f32 %v643, %v746
        %v749 = vmax.f32 %v741, 0.0
        %v750 = vmax.f32 %v742, 0.0
        %s751 = scalar_lea.vmem %s193, 48 [#allocation12]
        %752 = vst [vmem:[%s751] sm:$0xff] %v749
        %753 = vst [vmem:[%s751 + $0x8] sm:$0xff] %v750
        %754 = vst [vmem:[#allocation2] sm:$0xff] %v749
        %755 = vst [vmem:[#allocation2 + $0x8] sm:$0xff] %v750
        %756 = vst [vmem:[#allocation3] sm:$0xff] %v741
        %757 = vst [vmem:[#allocation3 + $0x8] sm:$0xff] %v742
        %758 = vst [vmem:[#allocation4] sm:$0xff] %v747
        %759 = vst [vmem:[#allocation4 + $0x8] sm:$0xff] %v748
        %s760 = sand.u32 %s93, 1
        %s761 = scalar_lea.sflag [#allocation9], %s760
        %s762 = sand.u32 %s93, 1
        %s763 = smul.addr %s762, 64
        %s764 = scalar_lea.vmem [#allocation12], %s763
        // Predicated region
        $region49: #{tpu_custom_call.1} parent=27 // pred_check
          %p765 = pneg %p103
        $region50: #{tpu_custom_call.1} parent=27 // pred_check_branch
          %767 = sbr.rel (%p765) target = $region52
        $region51: #{tpu_custom_call.1} parent=27 // pred_region
          %s768 = smul.u32 4, %s27
          %s770 = ssub.s32 1024, 1024
          %771 = vsyncadd %s761, %s770
          %s772 = smul.addr %s26, 2
          %s773 = smul.addr %s768, 2
          %s774 = sadd.s32 %s772, %s773
          %s775 = smul.addr %s774, 128
          %s776 = scalar_lea.hbm %s4, %s775
          %s777 = sshll.u32 %s764, 4
          %s778 = int_to_ptr.vmem [resolvable:$true] %s777
          %783 = dma.vmem_to_hbm [thread:$0]  %s778, 1024, %s776, %s761, 256, 256, 16
        $region52: #{tpu_custom_call.1} parent=27 // pred_fallthru
          _
      $region28: #{tpu_custom_call.1} parent=5 // pred_fallthru
        _
      %p784 = scmp.le.s32.totalorder 2, %s17
      // Predicated region
      $region53: #{tpu_custom_call.1} parent=5 // pred_check
        %p785 = pneg %p784
      $region54: #{tpu_custom_call.1} parent=5 // pred_check_branch
        %787 = sbr.rel (%p785) target = $region56
      $region55: #{tpu_custom_call.1} parent=5 // pred_region
        %s788 = ssub.s32 %s17, 2
        // Predicated region
        $region57: #{tpu_custom_call.1} parent=55 // pred_check
          %p789 = pneg %p109
        $region58: #{tpu_custom_call.1} parent=55 // pred_check_branch
          %791 = sbr.rel (%p789) target = $region60
        $region59: #{tpu_custom_call.1} parent=55 // pred_region
          %s792 = sand.u32 %s94, 1
          %s793 = scalar_lea.sflag [#allocation9], %s792
          %s794 = sand.u32 %s94, 1
          %s795 = smul.addr %s794, 64
          %s796 = scalar_lea.vmem [#allocation12], %s795
          %797 = dma.done %s793, 1024
        $region60: #{tpu_custom_call.1} parent=55 // pred_fallthru
          _
      $region56: #{tpu_custom_call.1} parent=5 // pred_fallthru
        _
    $region6: #{tpu_custom_call.1} parent=1 // loop_footer
      %s21 = sadd.s32 1, %s17
    $region7: #{tpu_custom_call.1} parent=1 // loop_footer_branch
      %16 = sbr.rel target = $region3
    $region8: #{tpu_custom_call.1} parent=1 // loop_exit
      _
    %798 = vsyncpa [#allocation8], 1
    %s799 = scalar_lea.sflag [#allocation8], 1
    %800 = vsyncpa %s799, 1
    %801 = vsyncpa [#allocation11], 1
    %802 = vsyncpa [#allocation9], 1
    %s803 = scalar_lea.sflag [#allocation9], 1
    %804 = vsyncpa %s803, 1
  %805 = vsyncmov [#allocation6]
  %s806 = vpop.sfrf %805
  %p807 = scmp.eq.s32.totalorder %s806, 0
  %p808 = pneg %p807
  %810 = shalt.err (%p808)
  %s811 = scalar_lea.sflag [#allocation6], 1
  %812 = vsyncmov %s811
  %s813 = vpop.sfrf %812
  %p814 = scmp.eq.s32.totalorder %s813, 0
  %p815 = pneg %p814
  %817 = shalt.err (%p815)

</llo_original>
